<compile_context>
chip_gen: v7x
topology: tpu7x:2x2x1
jax: 0.10.0
libtpu: 0.0.40
codegen_flags: <defaults>
</compile_context>

<pallas_src>
import functools

import jax
import jax.numpy as jnp
from jax.experimental import pallas as pl
from jax.experimental.pallas import tpu as pltpu


def _rnn_kernel(x_ref, wih_ref, whh_ref, b_ref, wcl_ref, bcl_ref, out_ref,
                *, seq_len, batch_pad, batch_valid):
    """Single-invocation RNN forward.

    x_ref:   (S*Bp, I) bf16  time-major flattened input (batch padded to Bp)
    wih_ref: (I, H)    bf16  W_ih^T
    whh_ref: (H, H)    bf16  W_hh^T
    b_ref:   (1, H)    f32   b_ih + b_hh (pre-summed)
    wcl_ref: (H, O)    bf16  W_cl^T
    bcl_ref: (1, O)    f32   b_cl
    out_ref: (Bp, O)   f32   log-softmax(dim=0); padded rows are -inf (stripped in wrapper)
    """
    # Hoisted, loop-invariant input projection (+ pre-summed bias): one bf16 MXU matmul,
    # f32 accumulation.  Only h @ W_hh + tanh remains on the serial critical path.
    xp = (jnp.dot(x_ref[...], wih_ref[...], preferred_element_type=jnp.float32)
          + b_ref[...])                                              # (S*Bp, H) f32

    whh = whh_ref[...]                                               # (H, H) bf16, reused
    h = jnp.zeros((batch_pad, whh.shape[0]), jnp.float32)
    # seq_len is a small static int -> fully unrolled, sublane-aligned static slices.
    for t in range(seq_len):
        hh = jnp.dot(h.astype(jnp.bfloat16), whh,
                     preferred_element_type=jnp.float32)             # (Bp, H) f32
        h = jnp.tanh(xp[t * batch_pad:(t + 1) * batch_pad, :] + hh)

    # Linear head on the final hidden state.
    logits = (jnp.dot(h.astype(jnp.bfloat16), wcl_ref[...],
                      preferred_element_type=jnp.float32)
              + bcl_ref[...])                                        # (Bp, O) f32

    # LogSoftmax over dim=0 (the batch axis), exactly as the PyTorch module does.
    # Padded batch rows MUST be masked to -inf so they do not corrupt the normalizer.
    row = jax.lax.broadcasted_iota(jnp.int32, logits.shape, 0)
    logits_m = jnp.where(row < batch_valid, logits,
                         jnp.full_like(logits, -jnp.inf))
    m = jnp.max(logits_m, axis=0, keepdims=True)
    lse = jnp.log(jnp.sum(jnp.exp(logits_m - m), axis=0, keepdims=True)) + m
    out_ref[...] = logits_m - lse


def rnn_example_forward(x, w_ih, w_hh, b_ih, b_hh, w_cl, b_cl):
    """x: (S, B, I). Weights in PyTorch conventions:
       w_ih (H, I), w_hh (H, H), b_ih (H,), b_hh (H,), w_cl (O, H), b_cl (O,)."""
    S, B, I = x.shape
    H = w_ih.shape[0]
    O = w_cl.shape[0]
    B_pad = max(8, ((B + 7) // 8) * 8)          # pad batch to an f32 sublane tile

    # Wrapper-side layout plumbing: pad batch, flatten time-major, pre-transpose weights,
    # cast matmul operands to bf16 (MXU-native), pre-sum the RNN biases (kept f32).
    x_p = jnp.pad(x.astype(jnp.float32), ((0, 0), (0, B_pad - B), (0, 0)))
    x_flat = x_p.reshape(S * B_pad, I).astype(jnp.bfloat16)          # (S*Bp, I)
    wih_t = jnp.transpose(w_ih).astype(jnp.bfloat16)                 # (I, H)
    whh_t = jnp.transpose(w_hh).astype(jnp.bfloat16)                 # (H, H)
    b = (b_ih + b_hh).reshape(1, H).astype(jnp.float32)              # (1, H)
    wcl_t = jnp.transpose(w_cl).astype(jnp.bfloat16)                 # (H, O)
    bcl2 = b_cl.reshape(1, O).astype(jnp.float32)                    # (1, O)

    vmem = pl.BlockSpec(memory_space=pltpu.MemorySpace.VMEM)         # whole array, VMEM-resident
    kernel = functools.partial(_rnn_kernel, seq_len=S,
                               batch_pad=B_pad, batch_valid=B)

    out_pad = pl.pallas_call(
        kernel,
        out_shape=jax.ShapeDtypeStruct((B_pad, O), jnp.float32),
        in_specs=[vmem] * 6,
        out_specs=vmem,
        compiler_params=pltpu.CompilerParams(vmem_limit_bytes=32 * 1024 * 1024),
    )(x_flat, wih_t, whh_t, b, wcl_t, bcl2)
    return out_pad[:B]                                               # strip padded rows


def reference_forward_bf16(x, w_ih, w_hh, b_ih, b_hh, w_cl, b_cl):
    """Pure-JAX reference using the same bf16-operand / f32-accumulate matmuls."""
    S, B, I = x.shape
    H = w_ih.shape[0]
    wih = w_ih.astype(jnp.bfloat16)
    whh = w_hh.astype(jnp.bfloat16)
    wcl = w_cl.astype(jnp.bfloat16)
    b = (b_ih + b_hh).astype(jnp.float32)

    def step(h, x_t):
        pre = (jnp.dot(x_t.astype(jnp.bfloat16), wih.T,
                       preferred_element_type=jnp.float32)
               + b
               + jnp.dot(h.astype(jnp.bfloat16), whh.T,
                         preferred_element_type=jnp.float32))
        return jnp.tanh(pre), None

    h0 = jnp.zeros((B, H), jnp.float32)
    h_last, _ = jax.lax.scan(step, h0, x.astype(jnp.float32))
    logits = (jnp.dot(h_last.astype(jnp.bfloat16), wcl.T,
                      preferred_element_type=jnp.float32)
              + b_cl.astype(jnp.float32))
    return jax.nn.log_softmax(logits, axis=0)


def reference_forward_f32(x, w_ih, w_hh, b_ih, b_hh, w_cl, b_cl):
    """Full-f32 reference matching PyTorch nn.RNN + Linear + LogSoftmax(dim=0)."""
    S, B, I = x.shape
    H = w_ih.shape[0]

    def step(h, x_t):
        return jnp.tanh(x_t @ w_ih.T + b_ih + h @ w_hh.T + b_hh), None

    h0 = jnp.zeros((B, H), jnp.float32)
    h_last, _ = jax.lax.scan(step, h0, x)
    logits = h_last @ w_cl.T + b_cl
    return jax.nn.log_softmax(logits, axis=0)


if __name__ == "__main__":
    # Small shapes consistent with the module (hidden_size = 128 as in the spec).
    S, B, I, H, O = 8, 2, 16, 128, 8

    key = jax.random.PRNGKey(0)
    ks = jax.random.split(key, 8)
    bound_rnn = 1.0 / jnp.sqrt(H)
    bound_cl = 1.0 / jnp.sqrt(H)

    x = jax.random.normal(ks[0], (S, B, I), dtype=jnp.float32)
    w_ih = jax.random.uniform(ks[1], (H, I), minval=-bound_rnn, maxval=bound_rnn)
    w_hh = jax.random.uniform(ks[2], (H, H), minval=-bound_rnn, maxval=bound_rnn)
    b_ih = jax.random.uniform(ks[3], (H,), minval=-bound_rnn, maxval=bound_rnn)
    b_hh = jax.random.uniform(ks[4], (H,), minval=-bound_rnn, maxval=bound_rnn)
    w_cl = jax.random.uniform(ks[5], (O, H), minval=-bound_cl, maxval=bound_cl)
    b_cl = jax.random.uniform(ks[6], (O,), minval=-bound_cl, maxval=bound_cl)

    out = rnn_example_forward(x, w_ih, w_hh, b_ih, b_hh, w_cl, b_cl)
    out = jax.block_until_ready(out)
    assert out.shape == (B, O)

    # Primary check: matched bf16-weight reference (same precision recipe as the kernel).
    ref_bf16 = reference_forward_bf16(x, w_ih, w_hh, b_ih, b_hh, w_cl, b_cl)
    assert jnp.allclose(out, ref_bf16, atol=2e-3, rtol=2e-3), "mismatch vs bf16 reference"

    # Sanity check vs the full-f32 reference (loose: bf16 weights drift slightly).
    ref_f32 = reference_forward_f32(x, w_ih, w_hh, b_ih, b_hh, w_cl, b_cl)
    assert jnp.allclose(out, ref_f32, atol=1e-1, rtol=1e-1), "mismatch vs f32 reference"

    print("KERNEL_OK")
</pallas_src>

<mosaic_0001>
module attributes {stable_mosaic.version = 11 : i64} {
  func.func @_rnn_kernel(%arg0: memref<64x16xbf16, #tpu.memory_space<vmem>>, %arg1: memref<16x128xbf16, #tpu.memory_space<vmem>>, %arg2: memref<128x128xbf16, #tpu.memory_space<vmem>>, %arg3: memref<1x128xf32, #tpu.memory_space<vmem>>, %arg4: memref<128x8xbf16, #tpu.memory_space<vmem>>, %arg5: memref<1x8xf32, #tpu.memory_space<vmem>>, %arg6: memref<8x8xf32, #tpu.memory_space<vmem>>) attributes {dimension_semantics = [], scalar_prefetch = 0 : i64, scratch_operands = 0 : i64, tpu.core_type = #tpu.core_type<tc>} {
    %c0 = arith.constant 0 : index
    %c0_0 = arith.constant 0 : index
    %0 = vector.load %arg0[%c0, %c0_0] : memref<64x16xbf16, #tpu.memory_space<vmem>>, vector<64x16xbf16>
    %c0_1 = arith.constant 0 : index
    %c0_2 = arith.constant 0 : index
    %1 = vector.load %arg1[%c0_1, %c0_2] : memref<16x128xbf16, #tpu.memory_space<vmem>>, vector<16x128xbf16>
    %cst = arith.constant dense<0.000000e+00> : vector<64x128xf32>
    %2 = tpu.matmul %0, %1, %cst {dimension_numbers = #tpu.dot_dimension_numbers<[1], [0], [0], [1], [0, 0, 1, 1], [], []>} : vector<64x16xbf16>, vector<16x128xbf16>, vector<64x128xf32> -> vector<64x128xf32>
    %c0_3 = arith.constant 0 : index
    %c0_4 = arith.constant 0 : index
    %3 = vector.load %arg3[%c0_3, %c0_4] : memref<1x128xf32, #tpu.memory_space<vmem>>, vector<1x128xf32>
    %4 = vector.broadcast %3 : vector<1x128xf32> to vector<64x128xf32>
    %5 = arith.addf %2, %4 : vector<64x128xf32>
    %c0_5 = arith.constant 0 : index
    %c0_6 = arith.constant 0 : index
    %6 = vector.load %arg2[%c0_5, %c0_6] : memref<128x128xbf16, #tpu.memory_space<vmem>>, vector<128x128xbf16>
    %cst_7 = arith.constant 0.000000e+00 : f32
    %7 = vector.broadcast %cst_7 : f32 to vector<8x128xf32>
    %8 = arith.truncf %7 : vector<8x128xf32> to vector<8x128xbf16>
    %cst_8 = arith.constant dense<0.000000e+00> : vector<8x128xf32>
    %9 = tpu.matmul %8, %6, %cst_8 {dimension_numbers = #tpu.dot_dimension_numbers<[1], [0], [0], [1], [0, 0, 1, 1], [], []>} : vector<8x128xbf16>, vector<128x128xbf16>, vector<8x128xf32> -> vector<8x128xf32>
    %10 = vector.extract_strided_slice %5 {offsets = [0, 0], sizes = [8, 128], strides = [1, 1]} : vector<64x128xf32> to vector<8x128xf32>
    %11 = arith.addf %10, %9 : vector<8x128xf32>
    %12 = math.tanh %11 : vector<8x128xf32>
    %13 = arith.truncf %12 : vector<8x128xf32> to vector<8x128xbf16>
    %cst_9 = arith.constant dense<0.000000e+00> : vector<8x128xf32>
    %14 = tpu.matmul %13, %6, %cst_9 {dimension_numbers = #tpu.dot_dimension_numbers<[1], [0], [0], [1], [0, 0, 1, 1], [], []>} : vector<8x128xbf16>, vector<128x128xbf16>, vector<8x128xf32> -> vector<8x128xf32>
    %15 = vector.extract_strided_slice %5 {offsets = [8, 0], sizes = [8, 128], strides = [1, 1]} : vector<64x128xf32> to vector<8x128xf32>
    %16 = arith.addf %15, %14 : vector<8x128xf32>
    %17 = math.tanh %16 : vector<8x128xf32>
    %18 = arith.truncf %17 : vector<8x128xf32> to vector<8x128xbf16>
    %cst_10 = arith.constant dense<0.000000e+00> : vector<8x128xf32>
    %19 = tpu.matmul %18, %6, %cst_10 {dimension_numbers = #tpu.dot_dimension_numbers<[1], [0], [0], [1], [0, 0, 1, 1], [], []>} : vector<8x128xbf16>, vector<128x128xbf16>, vector<8x128xf32> -> vector<8x128xf32>
    %20 = vector.extract_strided_slice %5 {offsets = [16, 0], sizes = [8, 128], strides = [1, 1]} : vector<64x128xf32> to vector<8x128xf32>
    %21 = arith.addf %20, %19 : vector<8x128xf32>
    %22 = math.tanh %21 : vector<8x128xf32>
    %23 = arith.truncf %22 : vector<8x128xf32> to vector<8x128xbf16>
    %cst_11 = arith.constant dense<0.000000e+00> : vector<8x128xf32>
    %24 = tpu.matmul %23, %6, %cst_11 {dimension_numbers = #tpu.dot_dimension_numbers<[1], [0], [0], [1], [0, 0, 1, 1], [], []>} : vector<8x128xbf16>, vector<128x128xbf16>, vector<8x128xf32> -> vector<8x128xf32>
    %25 = vector.extract_strided_slice %5 {offsets = [24, 0], sizes = [8, 128], strides = [1, 1]} : vector<64x128xf32> to vector<8x128xf32>
    %26 = arith.addf %25, %24 : vector<8x128xf32>
    %27 = math.tanh %26 : vector<8x128xf32>
    %28 = arith.truncf %27 : vector<8x128xf32> to vector<8x128xbf16>
    %cst_12 = arith.constant dense<0.000000e+00> : vector<8x128xf32>
    %29 = tpu.matmul %28, %6, %cst_12 {dimension_numbers = #tpu.dot_dimension_numbers<[1], [0], [0], [1], [0, 0, 1, 1], [], []>} : vector<8x128xbf16>, vector<128x128xbf16>, vector<8x128xf32> -> vector<8x128xf32>
    %30 = vector.extract_strided_slice %5 {offsets = [32, 0], sizes = [8, 128], strides = [1, 1]} : vector<64x128xf32> to vector<8x128xf32>
    %31 = arith.addf %30, %29 : vector<8x128xf32>
    %32 = math.tanh %31 : vector<8x128xf32>
    %33 = arith.truncf %32 : vector<8x128xf32> to vector<8x128xbf16>
    %cst_13 = arith.constant dense<0.000000e+00> : vector<8x128xf32>
    %34 = tpu.matmul %33, %6, %cst_13 {dimension_numbers = #tpu.dot_dimension_numbers<[1], [0], [0], [1], [0, 0, 1, 1], [], []>} : vector<8x128xbf16>, vector<128x128xbf16>, vector<8x128xf32> -> vector<8x128xf32>
    %35 = vector.extract_strided_slice %5 {offsets = [40, 0], sizes = [8, 128], strides = [1, 1]} : vector<64x128xf32> to vector<8x128xf32>
    %36 = arith.addf %35, %34 : vector<8x128xf32>
    %37 = math.tanh %36 : vector<8x128xf32>
    %38 = arith.truncf %37 : vector<8x128xf32> to vector<8x128xbf16>
    %cst_14 = arith.constant dense<0.000000e+00> : vector<8x128xf32>
    %39 = tpu.matmul %38, %6, %cst_14 {dimension_numbers = #tpu.dot_dimension_numbers<[1], [0], [0], [1], [0, 0, 1, 1], [], []>} : vector<8x128xbf16>, vector<128x128xbf16>, vector<8x128xf32> -> vector<8x128xf32>
    %40 = vector.extract_strided_slice %5 {offsets = [48, 0], sizes = [8, 128], strides = [1, 1]} : vector<64x128xf32> to vector<8x128xf32>
    %41 = arith.addf %40, %39 : vector<8x128xf32>
    %42 = math.tanh %41 : vector<8x128xf32>
    %43 = arith.truncf %42 : vector<8x128xf32> to vector<8x128xbf16>
    %cst_15 = arith.constant dense<0.000000e+00> : vector<8x128xf32>
    %44 = tpu.matmul %43, %6, %cst_15 {dimension_numbers = #tpu.dot_dimension_numbers<[1], [0], [0], [1], [0, 0, 1, 1], [], []>} : vector<8x128xbf16>, vector<128x128xbf16>, vector<8x128xf32> -> vector<8x128xf32>
    %45 = vector.extract_strided_slice %5 {offsets = [56, 0], sizes = [8, 128], strides = [1, 1]} : vector<64x128xf32> to vector<8x128xf32>
    %46 = arith.addf %45, %44 : vector<8x128xf32>
    %47 = math.tanh %46 : vector<8x128xf32>
    %48 = arith.truncf %47 : vector<8x128xf32> to vector<8x128xbf16>
    %c0_16 = arith.constant 0 : index
    %c0_17 = arith.constant 0 : index
    %49 = vector.load %arg4[%c0_16, %c0_17] : memref<128x8xbf16, #tpu.memory_space<vmem>>, vector<128x8xbf16>
    %cst_18 = arith.constant dense<0.000000e+00> : vector<8x8xf32>
    %50 = tpu.matmul %48, %49, %cst_18 {dimension_numbers = #tpu.dot_dimension_numbers<[1], [0], [0], [1], [0, 0, 1, 1], [], []>} : vector<8x128xbf16>, vector<128x8xbf16>, vector<8x8xf32> -> vector<8x8xf32>
    %c0_19 = arith.constant 0 : index
    %c0_20 = arith.constant 0 : index
    %51 = vector.load %arg5[%c0_19, %c0_20] : memref<1x8xf32, #tpu.memory_space<vmem>>, vector<1x8xf32>
    %52 = vector.broadcast %51 : vector<1x8xf32> to vector<8x8xf32>
    %53 = arith.addf %50, %52 : vector<8x8xf32>
    %54 = tpu.iota {dimensions = array<i32: 0>} : vector<8x8xi32>
    %c2_i32 = arith.constant 2 : i32
    %55 = vector.broadcast %c2_i32 : i32 to vector<8x8xi32>
    %56 = arith.cmpi slt, %54, %55 : vector<8x8xi32>
    %cst_21 = arith.constant 0xFF800000 : f32
    %57 = vector.broadcast %cst_21 : f32 to vector<8x8xf32>
    %58 = arith.select %56, %53, %57 : vector<8x8xi1>, vector<8x8xf32>
    %cst_22 = arith.constant dense<0xFF800000> : vector<8xf32>
    %59 = vector.multi_reduction <maximumf>, %58, %cst_22 [0] : vector<8x8xf32> to vector<8xf32>
    %60 = vector.shape_cast %59 : vector<8xf32> to vector<1x8xf32>
    %61 = vector.broadcast %60 : vector<1x8xf32> to vector<8x8xf32>
    %62 = arith.subf %58, %61 : vector<8x8xf32>
    %63 = math.exp %62 : vector<8x8xf32>
    %cst_23 = arith.constant dense<0.000000e+00> : vector<8xf32>
    %64 = vector.multi_reduction <add>, %63, %cst_23 [0] : vector<8x8xf32> to vector<8xf32>
    %65 = vector.shape_cast %64 : vector<8xf32> to vector<1x8xf32>
    %66 = math.log %65 : vector<1x8xf32>
    %67 = arith.addf %66, %60 : vector<1x8xf32>
    %68 = vector.broadcast %67 : vector<1x8xf32> to vector<8x8xf32>
    %69 = arith.subf %58, %68 : vector<8x8xf32>
    %c0_24 = arith.constant 0 : index
    %c0_25 = arith.constant 0 : index
    %70 = vector.load %arg6[%c0_24, %c0_25] : memref<8x8xf32, #tpu.memory_space<vmem>>, vector<8x8xf32>
    tpu.vector_store %arg6[%c0_24, %c0_25], %69 {strides = array<i32>} : memref<8x8xf32, #tpu.memory_space<vmem>>, vector<8x8xf32>,
    return
  }
}

</mosaic_0001>

<llo_original>
// kernel: tpu_custom_call.1
$region0: #{tpu_custom_call.1}
  #allocation0 [shape = 'u32[]', space=smem, size = 0x4, offset = 0x4, fixed_abs, tag = 'smem constant byte address 0x4 - core index']
  #allocation1 [shape = 'u32[144,128]{1,0:T(1,128)}', space=vmem, size = 0x12000, scoped, tag = 'internal scratch']
  %s0 = inlined_call_operand.vmem [shape: bf16[64,16], index: 0, kind: input, shape index: {}]
  %s1 = inlined_call_operand.vmem [shape: bf16[16,128], index: 1, kind: input, shape index: {}]
  %s2 = inlined_call_operand.vmem [shape: bf16[128,128], index: 2, kind: input, shape index: {}]
  %s3 = inlined_call_operand.vmem [shape: f32[1,128], index: 3, kind: input, shape index: {}]
  %s4 = inlined_call_operand.vmem [shape: bf16[128,8], index: 4, kind: input, shape index: {}]
  %s5 = inlined_call_operand.vmem [shape: f32[1,8], index: 5, kind: input, shape index: {}]
  %s6 = inlined_call_operand.hbm [shape: f32[8,8], index: 6, kind: output, shape index: {}]
  %s7 = sld [smem:[#allocation0]]
  $region34: #{tpu_custom_call.1} parent=0
    _
  %s9 = ssub.s32 1, %s7
  %s10 = scalar_select 0, %s9, %s7
  $region1: #{tpu_custom_call.1} parent=0
    #allocation2 [shape = 'u8[4096]{0}', space=vmem, size = 0x1000, scoped, tag = 'output window, operand 0, single buffered']
    #allocation3 [shape = 's32[1]{0}', space=sflag, size = 0x4, scoped, tag = 'scoped memory for tpu_custom_call.1']
    %11 = vsyncpa [#allocation3], 0
    // Predicated region
    $region2: #{tpu_custom_call.1} parent=1 // pred_check
      _
    $region3: #{tpu_custom_call.1} parent=1 // pred_check_branch
      %13 = sbr.rel (0) target = $region5
    $region4: #{tpu_custom_call.1} parent=1 // pred_region
      _
    $region5: #{tpu_custom_call.1} parent=1 // pred_fallthru
      _
    // Predicated region
    $region6: #{tpu_custom_call.1} parent=1 // pred_check
      _
    $region7: #{tpu_custom_call.1} parent=1 // pred_check_branch
      %15 = sbr.rel (0) target = $region9
    $region8: #{tpu_custom_call.1} parent=1 // pred_region
      _
    $region9: #{tpu_custom_call.1} parent=1 // pred_fallthru
      _
    // Predicated region
    $region10: #{tpu_custom_call.1} parent=1 // pred_check
      _
    $region11: #{tpu_custom_call.1} parent=1 // pred_check_branch
      %17 = sbr.rel (0) target = $region13
    $region12: #{tpu_custom_call.1} parent=1 // pred_region
      _
    $region13: #{tpu_custom_call.1} parent=1 // pred_fallthru
      _
    // Predicated region
    $region14: #{tpu_custom_call.1} parent=1 // pred_check
      _
    $region15: #{tpu_custom_call.1} parent=1 // pred_check_branch
      %19 = sbr.rel (0) target = $region17
    $region16: #{tpu_custom_call.1} parent=1 // pred_region
      _
    $region17: #{tpu_custom_call.1} parent=1 // pred_fallthru
      _
    // Predicated region
    $region18: #{tpu_custom_call.1} parent=1 // pred_check
      _
    $region19: #{tpu_custom_call.1} parent=1 // pred_check_branch
      %21 = sbr.rel (0) target = $region21
    $region20: #{tpu_custom_call.1} parent=1 // pred_region
      _
    $region21: #{tpu_custom_call.1} parent=1 // pred_fallthru
      _
    // Predicated region
    $region22: #{tpu_custom_call.1} parent=1 // pred_check
      _
    $region23: #{tpu_custom_call.1} parent=1 // pred_check_branch
      %23 = sbr.rel (0) target = $region25
    $region24: #{tpu_custom_call.1} parent=1 // pred_region
      _
    $region25: #{tpu_custom_call.1} parent=1 // pred_fallthru
      _
    %v25 = vld [vmem:[%s0] sm:$0xf]
    %v26 = vld [vmem:[%s0 + $0x4] sm:$0xf]
    %v27 = vld [vmem:[%s0 + $0x8] sm:$0xf]
    %v28 = vld [vmem:[%s0 + $0xc] sm:$0xf]
    %v29 = vld [vmem:[%s0 + $0x10] sm:$0xf]
    %v30 = vld [vmem:[%s0 + $0x14] sm:$0xf]
    %v31 = vld [vmem:[%s0 + $0x18] sm:$0xf]
    %v32 = vld [vmem:[%s0 + $0x1c] sm:$0xf]
    %v33 = vld [vmem:[%s1] sm:$0xf]
    %v34 = vld [vmem:[%s1 + $0x4] sm:$0xf]
    %v35 = vld [vmem:[%s3] sm:$0x1]
    %v37 = vlaneseq
    %v38 = vshrl.u32 %v37, 7
    %v39 = vsub.s32 0, %v38
    %v40 = vrot.slane %v35, %v39
    %v50 = vunpack.c.l.b16 %v25
    %v51 = vunpack.c.l.b16 %v26
    %v52 = vunpack.c.l.b16 %v27
    %v53 = vunpack.c.l.b16 %v28
    %v54 = vunpack.c.l.b16 %v29
    %v55 = vunpack.c.l.b16 %v30
    %v56 = vunpack.c.l.b16 %v31
    %v57 = vunpack.c.l.b16 %v32
    %v58 = vpack.c.b16 %v51, %v50
    %v59 = vpack.c.b16 %v53, %v52
    %v60 = vpack.c.b16 %v55, %v54
    %v61 = vpack.c.b16 %v57, %v56
    %v64 = vunpack.c.l.b16 %v33
    %v65 = vunpack.c.l.b16 %v34
    %v66 = vpack.c.b16 %v65, %v64
    %vm68 = vcmask 130048
    %v70 = vsel %vm68, %v58, 0
    %v73 = vsel %vm68, %v59, 0
    %v76 = vsel %vm68, %v60, 0
    %v79 = vsel %vm68, %v61, 0
    %81 = vmatprep.subr.bf16.mxu0 0
    %82 = vmatpush1.bf16.msra.mxu0 %v66
    %83 = vmatprep.subr.bf16.mxu0 0
    %84 = vmatpush1.bf16.msra.mxu0 0
    %85 = vmatprep.subr.bf16.mxu0 0
    %86 = vmatpush1.bf16.msra.mxu0 0
    %87 = vmatprep.subr.bf16.mxu0 0
    %88 = vmatpush1.bf16.msra.mxu0 0
    %89 = vmatprep.subr.bf16.mxu0 0
    %90 = vmatpush1.bf16.msra.mxu0 0
    %91 = vmatprep.subr.bf16.mxu0 0
    %92 = vmatpush1.bf16.msra.mxu0 0
    %93 = vmatprep.subr.bf16.mxu0 0
    %94 = vmatpush1.bf16.msra.mxu0 0
    %95 = vmatprep.subr.bf16.mxu0 0
    %96 = vmatpush1.bf16.msra.mxu0 0
    %97 = vmatprep.subr.bf16.mxu0 0
    %98 = vmatpush1.bf16.msra.mxu0 0
    %99 = vmatprep.subr.bf16.mxu0 0
    %100 = vmatpush1.bf16.msra.mxu0 0
    %101 = vmatprep.subr.bf16.mxu0 0
    %102 = vmatpush1.bf16.msra.mxu0 0
    %103 = vmatprep.subr.bf16.mxu0 0
    %104 = vmatpush1.bf16.msra.mxu0 0
    %105 = vmatprep.subr.bf16.mxu0 0
    %106 = vmatpush1.bf16.msra.mxu0 0
    %107 = vmatprep.subr.bf16.mxu0 0
    %108 = vmatpush1.bf16.msra.mxu0 0
    %109 = vmatprep.subr.bf16.mxu0 0
    %110 = vmatpush1.bf16.msra.mxu0 0
    %111 = vmatprep.subr.bf16.mxu0 0
    %112 = vmatpush1.bf16.msra.mxu0 0
    %113 = vmatprep.mubr.bf16.mxu0 0
    %114 = vmatmul.mubr.bf16.gmra.mrb[0].mxu0 %v70
    %v115 = vpop.f32.mrb[0].mxu0
    %v116 = vadd.f32 %v40, %v115
    %v117 = vpop.f32.mrb[0].mxu0
    %v118 = vpop.f32.mrb[0].mxu0
    %v119 = vadd.f32 %v40, %v118
    %v120 = vpop.f32.mrb[0].mxu0
    %121 = vmatprep.mubr.bf16.mxu0 0
    %122 = vmatmul.mubr.bf16.gmra.mrb[0].mxu0 %v73
    %v123 = vpop.f32.mrb[0].mxu0
    %v124 = vadd.f32 %v40, %v123
    %v125 = vpop.f32.mrb[0].mxu0
    %v126 = vpop.f32.mrb[0].mxu0
    %v127 = vadd.f32 %v40, %v126
    %v128 = vpop.f32.mrb[0].mxu0
    %129 = vmatprep.mubr.bf16.mxu0 0
    %130 = vmatmul.mubr.bf16.gmra.mrb[0].mxu0 %v76
    %v131 = vpop.f32.mrb[0].mxu0
    %v132 = vadd.f32 %v40, %v131
    %v133 = vpop.f32.mrb[0].mxu0
    %v134 = vpop.f32.mrb[0].mxu0
    %v135 = vadd.f32 %v40, %v134
    %v136 = vpop.f32.mrb[0].mxu0
    %137 = vmatprep.mubr.bf16.mxu0 0
    %138 = vmatmul.mubr.bf16.gmra.mrb[0].mxu0 %v79
    %v139 = vpop.f32.mrb[0].mxu0
    %v140 = vadd.f32 %v40, %v139
    %v141 = vpop.f32.mrb[0].mxu0
    %v142 = vpop.f32.mrb[0].mxu0
    %v143 = vadd.f32 %v40, %v142
    %v144 = vpop.f32.mrb[0].mxu0
    %145 = vdwg.mxu0
    %v146 = vld [vmem:[%s2] sm:$0xf]
    %v147 = vld [vmem:[%s2 + $0x4] sm:$0xf]
    %v148 = vld [vmem:[%s2 + $0x8] sm:$0xf]
    %v149 = vld [vmem:[%s2 + $0xc] sm:$0xf]
    %v150 = vld [vmem:[%s2 + $0x10] sm:$0xf]
    %v151 = vld [vmem:[%s2 + $0x14] sm:$0xf]
    %v152 = vld [vmem:[%s2 + $0x18] sm:$0xf]
    %v153 = vld [vmem:[%s2 + $0x1c] sm:$0xf]
    %v154 = vld [vmem:[%s2 + $0x20] sm:$0xf]
    %v155 = vld [vmem:[%s2 + $0x24] sm:$0xf]
    %v156 = vld [vmem:[%s2 + $0x28] sm:$0xf]
    %v157 = vld [vmem:[%s2 + $0x2c] sm:$0xf]
    %v158 = vld [vmem:[%s2 + $0x30] sm:$0xf]
    %v159 = vld [vmem:[%s2 + $0x34] sm:$0xf]
    %v160 = vld [vmem:[%s2 + $0x38] sm:$0xf]
    %v161 = vld [vmem:[%s2 + $0x3c] sm:$0xf]
    %v178 = vunpack.c.l.b16 %v146
    %v179 = vunpack.c.l.b16 %v147
    %v180 = vunpack.c.l.b16 %v148
    %v181 = vunpack.c.l.b16 %v149
    %v182 = vunpack.c.l.b16 %v150
    %v183 = vunpack.c.l.b16 %v151
    %v184 = vunpack.c.l.b16 %v152
    %v185 = vunpack.c.l.b16 %v153
    %v186 = vunpack.c.l.b16 %v154
    %v187 = vunpack.c.l.b16 %v155
    %v188 = vunpack.c.l.b16 %v156
    %v189 = vunpack.c.l.b16 %v157
    %v190 = vunpack.c.l.b16 %v158
    %v191 = vunpack.c.l.b16 %v159
    %v192 = vunpack.c.l.b16 %v160
    %v193 = vunpack.c.l.b16 %v161
    %v194 = vpack.c.b16 %v179, %v178
    %v195 = vpack.c.b16 %v181, %v180
    %v196 = vpack.c.b16 %v183, %v182
    %v197 = vpack.c.b16 %v185, %v184
    %v198 = vpack.c.b16 %v187, %v186
    %v199 = vpack.c.b16 %v189, %v188
    %v200 = vpack.c.b16 %v191, %v190
    %v201 = vpack.c.b16 %v193, %v192
    %210 = vmatprep.subr.bf16.mxu0 0
    %211 = vmatpush1.bf16.msra.mxu0 %v194
    %212 = vmatprep.subr.bf16.mxu0 0
    %213 = vmatpush1.bf16.msra.mxu0 %v195
    %214 = vmatprep.subr.bf16.mxu0 0
    %215 = vmatpush1.bf16.msra.mxu0 %v196
    %216 = vmatprep.subr.bf16.mxu0 0
    %217 = vmatpush1.bf16.msra.mxu0 %v197
    %218 = vmatprep.subr.bf16.mxu0 0
    %219 = vmatpush1.bf16.msra.mxu0 %v198
    %220 = vmatprep.subr.bf16.mxu0 0
    %221 = vmatpush1.bf16.msra.mxu0 %v199
    %222 = vmatprep.subr.bf16.mxu0 0
    %223 = vmatpush1.bf16.msra.mxu0 %v200
    %224 = vmatprep.subr.bf16.mxu0 0
    %225 = vmatpush1.bf16.msra.mxu0 %v201
    %226 = vmatprep.subr.bf16.mxu0 0
    %227 = vmatpush1.bf16.msra.mxu0 0
    %228 = vmatprep.subr.bf16.mxu0 0
    %229 = vmatpush1.bf16.msra.mxu0 0
    %230 = vmatprep.subr.bf16.mxu0 0
    %231 = vmatpush1.bf16.msra.mxu0 0
    %232 = vmatprep.subr.bf16.mxu0 0
    %233 = vmatpush1.bf16.msra.mxu0 0
    %234 = vmatprep.subr.bf16.mxu0 0
    %235 = vmatpush1.bf16.msra.mxu0 0
    %236 = vmatprep.subr.bf16.mxu0 0
    %237 = vmatpush1.bf16.msra.mxu0 0
    %238 = vmatprep.subr.bf16.mxu0 0
    %239 = vmatpush1.bf16.msra.mxu0 0
    %240 = vmatprep.subr.bf16.mxu0 0
    %241 = vmatpush1.bf16.msra.mxu0 0
    %242 = vmatprep.mubr.bf16.mxu0 0
    %243 = vmatmul.mubr.bf16.gmra.mrb[0].mxu0 0
    %v244 = vpop.f32.mrb[0].mxu0
    %v245 = vadd.f32 0.0, %v244
    %v246 = vpop.f32.mrb[0].mxu0
    %v247 = vpop.f32.mrb[0].mxu0
    %v248 = vpop.f32.mrb[0].mxu0
    %249 = vdwg.mxu0
    %v250 = vadd.f32 %v116, %v245
    %v251 = vtanh.pop %v250
    %v252 = vpack.c.bf16 %v251, %v251
    %253 = vmatprep.subr.bf16.mxu0 0
    %254 = vmatpush1.bf16.msra.mxu0 %v194
    %255 = vmatprep.subr.bf16.mxu0 0
    %256 = vmatpush1.bf16.msra.mxu0 %v195
    %257 = vmatprep.subr.bf16.mxu0 0
    %258 = vmatpush1.bf16.msra.mxu0 %v196
    %259 = vmatprep.subr.bf16.mxu0 0
    %260 = vmatpush1.bf16.msra.mxu0 %v197
    %261 = vmatprep.subr.bf16.mxu0 0
    %262 = vmatpush1.bf16.msra.mxu0 %v198
    %263 = vmatprep.subr.bf16.mxu0 0
    %264 = vmatpush1.bf16.msra.mxu0 %v199
    %265 = vmatprep.subr.bf16.mxu0 0
    %266 = vmatpush1.bf16.msra.mxu0 %v200
    %267 = vmatprep.subr.bf16.mxu0 0
    %268 = vmatpush1.bf16.msra.mxu0 %v201
    %269 = vmatprep.subr.bf16.mxu0 0
    %270 = vmatpush1.bf16.msra.mxu0 0
    %271 = vmatprep.subr.bf16.mxu0 0
    %272 = vmatpush1.bf16.msra.mxu0 0
    %273 = vmatprep.subr.bf16.mxu0 0
    %274 = vmatpush1.bf16.msra.mxu0 0
    %275 = vmatprep.subr.bf16.mxu0 0
    %276 = vmatpush1.bf16.msra.mxu0 0
    %277 = vmatprep.subr.bf16.mxu0 0
    %278 = vmatpush1.bf16.msra.mxu0 0
    %279 = vmatprep.subr.bf16.mxu0 0
    %280 = vmatpush1.bf16.msra.mxu0 0
    %281 = vmatprep.subr.bf16.mxu0 0
    %282 = vmatpush1.bf16.msra.mxu0 0
    %283 = vmatprep.subr.bf16.mxu0 0
    %284 = vmatpush1.bf16.msra.mxu0 0
    %285 = vmatprep.mubr.bf16.mxu0 0
    %286 = vmatmul.mubr.bf16.gmra.mrb[0].mxu0 %v252
    %v287 = vpop.f32.mrb[0].mxu0
    %v288 = vadd.f32 0.0, %v287
    %v289 = vpop.f32.mrb[0].mxu0
    %v290 = vpop.f32.mrb[0].mxu0
    %v291 = vpop.f32.mrb[0].mxu0
    %292 = vdwg.mxu0
    %v293 = vadd.f32 %v119, %v288
    %v294 = vtanh.pop %v293
    %v295 = vpack.c.bf16 %v294, %v294
    %296 = vmatprep.subr.bf16.mxu0 0
    %297 = vmatpush1.bf16.msra.mxu0 %v194
    %298 = vmatprep.subr.bf16.mxu0 0
    %299 = vmatpush1.bf16.msra.mxu0 %v195
    %300 = vmatprep.subr.bf16.mxu0 0
    %301 = vmatpush1.bf16.msra.mxu0 %v196
    %302 = vmatprep.subr.bf16.mxu0 0
    %303 = vmatpush1.bf16.msra.mxu0 %v197
    %304 = vmatprep.subr.bf16.mxu0 0
    %305 = vmatpush1.bf16.msra.mxu0 %v198
    %306 = vmatprep.subr.bf16.mxu0 0
    %307 = vmatpush1.bf16.msra.mxu0 %v199
    %308 = vmatprep.subr.bf16.mxu0 0
    %309 = vmatpush1.bf16.msra.mxu0 %v200
    %310 = vmatprep.subr.bf16.mxu0 0
    %311 = vmatpush1.bf16.msra.mxu0 %v201
    %312 = vmatprep.subr.bf16.mxu0 0
    %313 = vmatpush1.bf16.msra.mxu0 0
    %314 = vmatprep.subr.bf16.mxu0 0
    %315 = vmatpush1.bf16.msra.mxu0 0
    %316 = vmatprep.subr.bf16.mxu0 0
    %317 = vmatpush1.bf16.msra.mxu0 0
    %318 = vmatprep.subr.bf16.mxu0 0
    %319 = vmatpush1.bf16.msra.mxu0 0
    %320 = vmatprep.subr.bf16.mxu0 0
    %321 = vmatpush1.bf16.msra.mxu0 0
    %322 = vmatprep.subr.bf16.mxu0 0
    %323 = vmatpush1.bf16.msra.mxu0 0
    %324 = vmatprep.subr.bf16.mxu0 0
    %325 = vmatpush1.bf16.msra.mxu0 0
    %326 = vmatprep.subr.bf16.mxu0 0
    %327 = vmatpush1.bf16.msra.mxu0 0
    %328 = vmatprep.mubr.bf16.mxu0 0
    %329 = vmatmul.mubr.bf16.gmra.mrb[0].mxu0 %v295
    %v330 = vpop.f32.mrb[0].mxu0
    %v331 = vadd.f32 0.0, %v330
    %v332 = vpop.f32.mrb[0].mxu0
    %v333 = vpop.f32.mrb[0].mxu0
    %v334 = vpop.f32.mrb[0].mxu0
    %335 = vdwg.mxu0
    %v336 = vadd.f32 %v124, %v331
    %v337 = vtanh.pop %v336
    %v338 = vpack.c.bf16 %v337, %v337
    %339 = vmatprep.subr.bf16.mxu0 0
    %340 = vmatpush1.bf16.msra.mxu0 %v194
    %341 = vmatprep.subr.bf16.mxu0 0
    %342 = vmatpush1.bf16.msra.mxu0 %v195
    %343 = vmatprep.subr.bf16.mxu0 0
    %344 = vmatpush1.bf16.msra.mxu0 %v196
    %345 = vmatprep.subr.bf16.mxu0 0
    %346 = vmatpush1.bf16.msra.mxu0 %v197
    %347 = vmatprep.subr.bf16.mxu0 0
    %348 = vmatpush1.bf16.msra.mxu0 %v198
    %349 = vmatprep.subr.bf16.mxu0 0
    %350 = vmatpush1.bf16.msra.mxu0 %v199
    %351 = vmatprep.subr.bf16.mxu0 0
    %352 = vmatpush1.bf16.msra.mxu0 %v200
    %353 = vmatprep.subr.bf16.mxu0 0
    %354 = vmatpush1.bf16.msra.mxu0 %v201
    %355 = vmatprep.subr.bf16.mxu0 0
    %356 = vmatpush1.bf16.msra.mxu0 0
    %357 = vmatprep.subr.bf16.mxu0 0
    %358 = vmatpush1.bf16.msra.mxu0 0
    %359 = vmatprep.subr.bf16.mxu0 0
    %360 = vmatpush1.bf16.msra.mxu0 0
    %361 = vmatprep.subr.bf16.mxu0 0
    %362 = vmatpush1.bf16.msra.mxu0 0
    %363 = vmatprep.subr.bf16.mxu0 0
    %364 = vmatpush1.bf16.msra.mxu0 0
    %365 = vmatprep.subr.bf16.mxu0 0
    %366 = vmatpush1.bf16.msra.mxu0 0
    %367 = vmatprep.subr.bf16.mxu0 0
    %368 = vmatpush1.bf16.msra.mxu0 0
    %369 = vmatprep.subr.bf16.mxu0 0
    %370 = vmatpush1.bf16.msra.mxu0 0
    %371 = vmatprep.mubr.bf16.mxu0 0
    %372 = vmatmul.mubr.bf16.gmra.mrb[0].mxu0 %v338
    %v373 = vpop.f32.mrb[0].mxu0
    %v374 = vadd.f32 0.0, %v373
    %v375 = vpop.f32.mrb[0].mxu0
    %v376 = vpop.f32.mrb[0].mxu0
    %v377 = vpop.f32.mrb[0].mxu0
    %378 = vdwg.mxu0
    %v379 = vadd.f32 %v127, %v374
    %v380 = vtanh.pop %v379
    %v381 = vpack.c.bf16 %v380, %v380
    %382 = vmatprep.subr.bf16.mxu0 0
    %383 = vmatpush1.bf16.msra.mxu0 %v194
    %384 = vmatprep.subr.bf16.mxu0 0
    %385 = vmatpush1.bf16.msra.mxu0 %v195
    %386 = vmatprep.subr.bf16.mxu0 0
    %387 = vmatpush1.bf16.msra.mxu0 %v196
    %388 = vmatprep.subr.bf16.mxu0 0
    %389 = vmatpush1.bf16.msra.mxu0 %v197
    %390 = vmatprep.subr.bf16.mxu0 0
    %391 = vmatpush1.bf16.msra.mxu0 %v198
    %392 = vmatprep.subr.bf16.mxu0 0
    %393 = vmatpush1.bf16.msra.mxu0 %v199
    %394 = vmatprep.subr.bf16.mxu0 0
    %395 = vmatpush1.bf16.msra.mxu0 %v200
    %396 = vmatprep.subr.bf16.mxu0 0
    %397 = vmatpush1.bf16.msra.mxu0 %v201
    %398 = vmatprep.subr.bf16.mxu0 0
    %399 = vmatpush1.bf16.msra.mxu0 0
    %400 = vmatprep.subr.bf16.mxu0 0
    %401 = vmatpush1.bf16.msra.mxu0 0
    %402 = vmatprep.subr.bf16.mxu0 0
    %403 = vmatpush1.bf16.msra.mxu0 0
    %404 = vmatprep.subr.bf16.mxu0 0
    %405 = vmatpush1.bf16.msra.mxu0 0
    %406 = vmatprep.subr.bf16.mxu0 0
    %407 = vmatpush1.bf16.msra.mxu0 0
    %408 = vmatprep.subr.bf16.mxu0 0
    %409 = vmatpush1.bf16.msra.mxu0 0
    %410 = vmatprep.subr.bf16.mxu0 0
    %411 = vmatpush1.bf16.msra.mxu0 0
    %412 = vmatprep.subr.bf16.mxu0 0
    %413 = vmatpush1.bf16.msra.mxu0 0
    %414 = vmatprep.mubr.bf16.mxu0 0
    %415 = vmatmul.mubr.bf16.gmra.mrb[0].mxu0 %v381
    %v416 = vpop.f32.mrb[0].mxu0
    %v417 = vadd.f32 0.0, %v416
    %v418 = vpop.f32.mrb[0].mxu0
    %v419 = vpop.f32.mrb[0].mxu0
    %v420 = vpop.f32.mrb[0].mxu0
    %421 = vdwg.mxu0
    %v422 = vadd.f32 %v132, %v417
    %v423 = vtanh.pop %v422
    %v424 = vpack.c.bf16 %v423, %v423
    %425 = vmatprep.subr.bf16.mxu0 0
    %426 = vmatpush1.bf16.msra.mxu0 %v194
    %427 = vmatprep.subr.bf16.mxu0 0
    %428 = vmatpush1.bf16.msra.mxu0 %v195
    %429 = vmatprep.subr.bf16.mxu0 0
    %430 = vmatpush1.bf16.msra.mxu0 %v196
    %431 = vmatprep.subr.bf16.mxu0 0
    %432 = vmatpush1.bf16.msra.mxu0 %v197
    %433 = vmatprep.subr.bf16.mxu0 0
    %434 = vmatpush1.bf16.msra.mxu0 %v198
    %435 = vmatprep.subr.bf16.mxu0 0
    %436 = vmatpush1.bf16.msra.mxu0 %v199
    %437 = vmatprep.subr.bf16.mxu0 0
    %438 = vmatpush1.bf16.msra.mxu0 %v200
    %439 = vmatprep.subr.bf16.mxu0 0
    %440 = vmatpush1.bf16.msra.mxu0 %v201
    %441 = vmatprep.subr.bf16.mxu0 0
    %442 = vmatpush1.bf16.msra.mxu0 0
    %443 = vmatprep.subr.bf16.mxu0 0
    %444 = vmatpush1.bf16.msra.mxu0 0
    %445 = vmatprep.subr.bf16.mxu0 0
    %446 = vmatpush1.bf16.msra.mxu0 0
    %447 = vmatprep.subr.bf16.mxu0 0
    %448 = vmatpush1.bf16.msra.mxu0 0
    %449 = vmatprep.subr.bf16.mxu0 0
    %450 = vmatpush1.bf16.msra.mxu0 0
    %451 = vmatprep.subr.bf16.mxu0 0
    %452 = vmatpush1.bf16.msra.mxu0 0
    %453 = vmatprep.subr.bf16.mxu0 0
    %454 = vmatpush1.bf16.msra.mxu0 0
    %455 = vmatprep.subr.bf16.mxu0 0
    %456 = vmatpush1.bf16.msra.mxu0 0
    %457 = vmatprep.mubr.bf16.mxu0 0
    %458 = vmatmul.mubr.bf16.gmra.mrb[0].mxu0 %v424
    %v459 = vpop.f32.mrb[0].mxu0
    %v460 = vadd.f32 0.0, %v459
    %v461 = vpop.f32.mrb[0].mxu0
    %v462 = vpop.f32.mrb[0].mxu0
    %v463 = vpop.f32.mrb[0].mxu0
    %464 = vdwg.mxu0
    %v465 = vadd.f32 %v135, %v460
    %v466 = vtanh.pop %v465
    %v467 = vpack.c.bf16 %v466, %v466
    %468 = vmatprep.subr.bf16.mxu0 0
    %469 = vmatpush1.bf16.msra.mxu0 %v194
    %470 = vmatprep.subr.bf16.mxu0 0
    %471 = vmatpush1.bf16.msra.mxu0 %v195
    %472 = vmatprep.subr.bf16.mxu0 0
    %473 = vmatpush1.bf16.msra.mxu0 %v196
    %474 = vmatprep.subr.bf16.mxu0 0
    %475 = vmatpush1.bf16.msra.mxu0 %v197
    %476 = vmatprep.subr.bf16.mxu0 0
    %477 = vmatpush1.bf16.msra.mxu0 %v198
    %478 = vmatprep.subr.bf16.mxu0 0
    %479 = vmatpush1.bf16.msra.mxu0 %v199
    %480 = vmatprep.subr.bf16.mxu0 0
    %481 = vmatpush1.bf16.msra.mxu0 %v200
    %482 = vmatprep.subr.bf16.mxu0 0
    %483 = vmatpush1.bf16.msra.mxu0 %v201
    %484 = vmatprep.subr.bf16.mxu0 0
    %485 = vmatpush1.bf16.msra.mxu0 0
    %486 = vmatprep.subr.bf16.mxu0 0
    %487 = vmatpush1.bf16.msra.mxu0 0
    %488 = vmatprep.subr.bf16.mxu0 0
    %489 = vmatpush1.bf16.msra.mxu0 0
    %490 = vmatprep.subr.bf16.mxu0 0
    %491 = vmatpush1.bf16.msra.mxu0 0
    %492 = vmatprep.subr.bf16.mxu0 0
    %493 = vmatpush1.bf16.msra.mxu0 0
    %494 = vmatprep.subr.bf16.mxu0 0
    %495 = vmatpush1.bf16.msra.mxu0 0
    %496 = vmatprep.subr.bf16.mxu0 0
    %497 = vmatpush1.bf16.msra.mxu0 0
    %498 = vmatprep.subr.bf16.mxu0 0
    %499 = vmatpush1.bf16.msra.mxu0 0
    %500 = vmatprep.mubr.bf16.mxu0 0
    %501 = vmatmul.mubr.bf16.gmra.mrb[0].mxu0 %v467
    %v502 = vpop.f32.mrb[0].mxu0
    %v503 = vadd.f32 0.0, %v502
    %v504 = vpop.f32.mrb[0].mxu0
    %v505 = vpop.f32.mrb[0].mxu0
    %v506 = vpop.f32.mrb[0].mxu0
    %507 = vdwg.mxu0
    %v508 = vadd.f32 %v140, %v503
    %v509 = vtanh.pop %v508
    %v510 = vpack.c.bf16 %v509, %v509
    %511 = vmatprep.subr.bf16.mxu0 0
    %512 = vmatpush1.bf16.msra.mxu0 %v194
    %513 = vmatprep.subr.bf16.mxu0 0
    %514 = vmatpush1.bf16.msra.mxu0 %v195
    %515 = vmatprep.subr.bf16.mxu0 0
    %516 = vmatpush1.bf16.msra.mxu0 %v196
    %517 = vmatprep.subr.bf16.mxu0 0
    %518 = vmatpush1.bf16.msra.mxu0 %v197
    %519 = vmatprep.subr.bf16.mxu0 0
    %520 = vmatpush1.bf16.msra.mxu0 %v198
    %521 = vmatprep.subr.bf16.mxu0 0
    %522 = vmatpush1.bf16.msra.mxu0 %v199
    %523 = vmatprep.subr.bf16.mxu0 0
    %524 = vmatpush1.bf16.msra.mxu0 %v200
    %525 = vmatprep.subr.bf16.mxu0 0
    %526 = vmatpush1.bf16.msra.mxu0 %v201
    %527 = vmatprep.subr.bf16.mxu0 0
    %528 = vmatpush1.bf16.msra.mxu0 0
    %529 = vmatprep.subr.bf16.mxu0 0
    %530 = vmatpush1.bf16.msra.mxu0 0
    %531 = vmatprep.subr.bf16.mxu0 0
    %532 = vmatpush1.bf16.msra.mxu0 0
    %533 = vmatprep.subr.bf16.mxu0 0
    %534 = vmatpush1.bf16.msra.mxu0 0
    %535 = vmatprep.subr.bf16.mxu0 0
    %536 = vmatpush1.bf16.msra.mxu0 0
    %537 = vmatprep.subr.bf16.mxu0 0
    %538 = vmatpush1.bf16.msra.mxu0 0
    %539 = vmatprep.subr.bf16.mxu0 0
    %540 = vmatpush1.bf16.msra.mxu0 0
    %541 = vmatprep.subr.bf16.mxu0 0
    %542 = vmatpush1.bf16.msra.mxu0 0
    %543 = vmatprep.mubr.bf16.mxu0 0
    %544 = vmatmul.mubr.bf16.gmra.mrb[0].mxu0 %v510
    %v545 = vpop.f32.mrb[0].mxu0
    %v546 = vadd.f32 0.0, %v545
    %v547 = vpop.f32.mrb[0].mxu0
    %v548 = vpop.f32.mrb[0].mxu0
    %v549 = vpop.f32.mrb[0].mxu0
    %550 = vdwg.mxu0
    %v551 = vadd.f32 %v143, %v546
    %v552 = vtanh.pop %v551
    %v553 = vpack.c.bf16 %v552, %v552
    %v554 = vld [vmem:[%s4] sm:$0xf]
    %v555 = vld [vmem:[%s4 + $0x4] sm:$0xf]
    %v556 = vld [vmem:[%s4 + $0x8] sm:$0xf]
    %v557 = vld [vmem:[%s4 + $0xc] sm:$0xf]
    %v558 = vld [vmem:[%s4 + $0x10] sm:$0xf]
    %v559 = vld [vmem:[%s4 + $0x14] sm:$0xf]
    %v560 = vld [vmem:[%s4 + $0x18] sm:$0xf]
    %v561 = vld [vmem:[%s4 + $0x1c] sm:$0xf]
    %v562 = vld [vmem:[%s4 + $0x20] sm:$0xf]
    %v563 = vld [vmem:[%s4 + $0x24] sm:$0xf]
    %v564 = vld [vmem:[%s4 + $0x28] sm:$0xf]
    %v565 = vld [vmem:[%s4 + $0x2c] sm:$0xf]
    %v566 = vld [vmem:[%s4 + $0x30] sm:$0xf]
    %v567 = vld [vmem:[%s4 + $0x34] sm:$0xf]
    %v568 = vld [vmem:[%s4 + $0x38] sm:$0xf]
    %v569 = vld [vmem:[%s4 + $0x3c] sm:$0xf]
    %v570 = vld [vmem:[%s5] sm:$0x1]
    %v572 = vlaneseq
    %v573 = vshrl.u32 %v572, 7
    %v574 = vsub.s32 0, %v573
    %v575 = vrot.slane %v570, %v574
    %v593 = vunpack.c.l.b16 %v554
    %v594 = vunpack.c.l.b16 %v555
    %v595 = vunpack.c.l.b16 %v556
    %v596 = vunpack.c.l.b16 %v557
    %v597 = vunpack.c.l.b16 %v558
    %v598 = vunpack.c.l.b16 %v559
    %v599 = vunpack.c.l.b16 %v560
    %v600 = vunpack.c.l.b16 %v561
    %v601 = vunpack.c.l.b16 %v562
    %v602 = vunpack.c.l.b16 %v563
    %v603 = vunpack.c.l.b16 %v564
    %v604 = vunpack.c.l.b16 %v565
    %v605 = vunpack.c.l.b16 %v566
    %v606 = vunpack.c.l.b16 %v567
    %v607 = vunpack.c.l.b16 %v568
    %v608 = vunpack.c.l.b16 %v569
    %v609 = vpack.c.b16 %v594, %v593
    %v610 = vpack.c.b16 %v596, %v595
    %v611 = vpack.c.b16 %v598, %v597
    %v612 = vpack.c.b16 %v600, %v599
    %v613 = vpack.c.b16 %v602, %v601
    %v614 = vpack.c.b16 %v604, %v603
    %v615 = vpack.c.b16 %v606, %v605
    %v616 = vpack.c.b16 %v608, %v607
    %625 = vmatprep.subr.bf16.mxu0 0
    %626 = vmatpush1.bf16.msra.mxu0 %v609
    %627 = vmatprep.subr.bf16.mxu0 0
    %628 = vmatpush1.bf16.msra.mxu0 %v610
    %629 = vmatprep.subr.bf16.mxu0 0
    %630 = vmatpush1.bf16.msra.mxu0 %v611
    %631 = vmatprep.subr.bf16.mxu0 0
    %632 = vmatpush1.bf16.msra.mxu0 %v612
    %633 = vmatprep.subr.bf16.mxu0 0
    %634 = vmatpush1.bf16.msra.mxu0 %v613
    %635 = vmatprep.subr.bf16.mxu0 0
    %636 = vmatpush1.bf16.msra.mxu0 %v614
    %637 = vmatprep.subr.bf16.mxu0 0
    %638 = vmatpush1.bf16.msra.mxu0 %v615
    %639 = vmatprep.subr.bf16.mxu0 0
    %640 = vmatpush1.bf16.msra.mxu0 %v616
    %641 = vmatprep.subr.bf16.mxu0 0
    %642 = vmatpush1.bf16.msra.mxu0 0
    %643 = vmatprep.subr.bf16.mxu0 0
    %644 = vmatpush1.bf16.msra.mxu0 0
    %645 = vmatprep.subr.bf16.mxu0 0
    %646 = vmatpush1.bf16.msra.mxu0 0
    %647 = vmatprep.subr.bf16.mxu0 0
    %648 = vmatpush1.bf16.msra.mxu0 0
    %649 = vmatprep.subr.bf16.mxu0 0
    %650 = vmatpush1.bf16.msra.mxu0 0
    %651 = vmatprep.subr.bf16.mxu0 0
    %652 = vmatpush1.bf16.msra.mxu0 0
    %653 = vmatprep.subr.bf16.mxu0 0
    %654 = vmatpush1.bf16.msra.mxu0 0
    %655 = vmatprep.subr.bf16.mxu0 0
    %656 = vmatpush1.bf16.msra.mxu0 0
    %657 = vmatprep.mubr.bf16.mxu0 0
    %658 = vmatmul.mubr.bf16.gmra.mrb[0].mxu0 %v553
    %v659 = vpop.f32.mrb[0].mxu0
    %v660 = vadd.f32 %v575, %v659
    %v661 = vpop.f32.mrb[0].mxu0
    %v662 = vpop.f32.mrb[0].mxu0
    %v663 = vpop.f32.mrb[0].mxu0
    %664 = vdwg.mxu0
    %v665 = vlaneseq
    %v666 = vshrl.u32 %v665, 7
    %vm667 = vcmp.lt.s32.totalorder %v666, 2
    %v668 = vsel %vm667, %v660, -inf
    %vm669 = vcmask 64512
    %v670 = vsel %vm669, %v668, -inf
    %v671 = vrot.slane %v670, 4
    %v672 = vmax.f32 %v670, %v671
    %v673 = vrot.slane %v672, 2
    %v674 = vmax.f32 %v672, %v673
    %v675 = vrot.slane %v674, 1
    %v676 = vmax.f32 %v674, %v675
    %v677 = vsub.f32 %v668, %v676
    %v678 = vmul.f32 %v677, 1.442695
    %v679 = vpow.pop %v678
    %v680 = vsel %vm669, %v679, 0.0
    %v681 = vrot.slane %v680, 4
    %v682 = vadd.f32 %v680, %v681
    %v683 = vrot.slane %v682, 2
    %v684 = vadd.f32 %v682, %v683
    %v685 = vrot.slane %v684, 1
    %v686 = vadd.f32 %v684, %v685
    %v687 = vlog2.pop %v686
    %v688 = vmul.f32 %v687, 0.6931472
    %v689 = vadd.f32 %v688, %v676
    %v690 = vsub.f32 %v668, %v689
    %691 = vst.msk [vmem:[#allocation2] sm:$0xff] %vm669, %v690
    // Predicated region
    $region26: #{tpu_custom_call.1} parent=1 // pred_check
      _
    $region27: #{tpu_custom_call.1} parent=1 // pred_check_branch
      %693 = sbr.rel (0) target = $region29
    $region28: #{tpu_custom_call.1} parent=1 // pred_region
      %s695 = ssub.s32 128, 128
      %696 = vsyncadd [#allocation3], %s695
      %s698 = sshll.u32 [#allocation2], 4
      %s699 = int_to_ptr.vmem [resolvable:$true] %s698
      %701 = dma.vmem_to_hbm [thread:$0]  %s699, 128, %s6, [#allocation3]
    $region29: #{tpu_custom_call.1} parent=1 // pred_fallthru
      _
    // Predicated region
    $region30: #{tpu_custom_call.1} parent=1 // pred_check
      _
    $region31: #{tpu_custom_call.1} parent=1 // pred_check_branch
      %703 = sbr.rel (0) target = $region33
    $region32: #{tpu_custom_call.1} parent=1 // pred_region
      %704 = dma.done [#allocation3], 128
    $region33: #{tpu_custom_call.1} parent=1 // pred_fallthru
      _
    %705 = vsyncpa [#allocation3], 1

</llo_original>
